<compile_context>
chip_gen: v7x
topology: tpu7x:2x2x1
jax: 0.10.0
libtpu: 0.0.40
codegen_flags: <defaults>
</compile_context>

<pallas_src>
import jax
import jax.numpy as jnp
import numpy as np
from jax.experimental import pallas as pl
from jax.experimental.pallas import tpu as pltpu

IN_DIM = 4
HIDDEN = 32
NUM_GRP = 4
N = 8                          # number of nodes per state
FLAT = N * HIDDEN              # 256: flattened GNN output per state
XIN = N * (IN_DIM + NUM_GRP)   # 64: [x_flat(32) | onehot_flat(32)]
HEAD_PV = 2 * N * N            # 128: [policy(64) | valueM(64)] lane-dense


def acnet_kernel(xin_ref, w1_ref, b1_ref, w2_ref, b2_ref, wh_ref, bh_ref,
                 wv_ref, bv_ref, pv_ref, v_ref):
    """Fused (folded) GNN layer + packed policy/valueM heads + VPU value head.

    Per grid step: a (BT, 64) tile of states flows through three lane-dense
    matmuls against VMEM-resident weights.
    """
    xin = xin_ref[...]                                               # (BT, 64)

    # agg_1 with the embedding layer pre-folded in (block-diag per-node weight)
    x1 = jnp.dot(xin, w1_ref[...], preferred_element_type=jnp.float32)
    x1 = jnp.maximum(x1 + b1_ref[...], 0.0)                          # (BT, 256)

    # agg_2 (block-diag per-node weight) -- x2 is already h = x2.view(-1)
    x2 = jnp.dot(x1, w2_ref[...], preferred_element_type=jnp.float32)
    x2 = jnp.maximum(x2 + b2_ref[...], 0.0)                          # (BT, 256)

    # packed heads: [policy | valueM] in one (256,128) lane-dense matmul
    pv_ref[...] = jnp.dot(x2, wh_ref[...],
                          preferred_element_type=jnp.float32) + bh_ref[...]

    # value head: 1-wide, keep it off the MXU (VPU multiply + XLU reduce)
    v_ref[...] = jnp.sum(x2 * wv_ref[...], axis=-1, keepdims=True) + bv_ref[...]


def init_linear(key, out_f, in_f):
    # PyTorch nn.Linear default init: U(-1/sqrt(in_f), 1/sqrt(in_f))
    kw, kb = jax.random.split(key)
    bound = 1.0 / (in_f ** 0.5)
    w = jax.random.uniform(kw, (out_f, in_f), jnp.float32, -bound, bound)
    b = jax.random.uniform(kb, (out_f,), jnp.float32, -bound, bound)
    return w, b


def make_params(key):
    keys = jax.random.split(key, 6)
    return {
        "emb":    init_linear(keys[0], HIDDEN, IN_DIM),
        "agg1":   init_linear(keys[1], HIDDEN, HIDDEN + NUM_GRP),
        "agg2":   init_linear(keys[2], HIDDEN, HIDDEN),
        "policy": init_linear(keys[3], N * N, FLAT),
        "value":  init_linear(keys[4], 1, FLAT),
        "valueM": init_linear(keys[5], N * N, FLAT),
    }


def pack_params(params):
    """One-time host-side packing into kernel-ready layouts (NOT per-call)."""
    we, be = params["emb"]         # (32, 4), (32,)
    wa1, ba1 = params["agg1"]      # (32, 36), (32,)
    wa2, ba2 = params["agg2"]      # (32, 32), (32,)
    wp, bp = params["policy"]      # (64, 256), (64,)
    wv, bv = params["value"]       # (1, 256), (1,)
    wvm, bvm = params["valueM"]    # (64, 256), (64,)

    # Fold the activation-free embedding into agg_1:
    #   relu((x @ We.T + be) @ Wa1e.T + onehot @ Wa1l.T + ba1)
    # = relu(x @ W_comb + onehot @ Wl + b_comb)
    w_comb = we.T @ wa1[:, :HIDDEN].T                      # (4, 32)
    b_comb = be @ wa1[:, :HIDDEN].T + ba1                  # (32,)
    wl = wa1[:, HIDDEN:].T                                 # (4, 32)

    # Block-diagonal per-node weights acting on the node-major flat layout.
    eye = jnp.eye(N, dtype=jnp.float32)
    w1 = jnp.concatenate([jnp.kron(eye, w_comb),           # rows 0:32  <- x_flat
                          jnp.kron(eye, wl)], axis=0)      # rows 32:64 <- onehot_flat
    b1 = jnp.tile(b_comb, N).reshape(1, FLAT)

    w2 = jnp.kron(eye, wa2.T)                              # (256, 256) block-diag
    b2 = jnp.tile(ba2, N).reshape(1, FLAT)

    # Packed heads: columns [0:64)=policy, [64:128)=valueM. Fully dense, no pad.
    wh = jnp.concatenate([wp.T, wvm.T], axis=1)            # (256, 128)
    bh = jnp.concatenate([bp, bvm]).reshape(1, HEAD_PV)

    return {
        "w1": w1, "b1": b1,
        "w2": w2, "b2": b2,
        "wh": wh, "bh": bh,
        "wv": wv.reshape(1, FLAT),                         # (1, 256)
        "bv": bv.reshape(1, 1),
    }


def _pick_batch_tile(batch):
    for bt in (256, 128, 64, 32, 16, 8):
        if batch % bt == 0:
            return bt
    return batch   # tiny/ragged batch: single full-size tile


@jax.jit
def acnet_forward(x, label, packed):
    """x: (B, N, IN_DIM) f32, label: (B, N) int32 -> (PI (B,64), V (B,1), VM (B,64))."""
    B = x.shape[0]
    BT = _pick_batch_tile(B)

    # Trivial input preprocessing (XLA): one_hot + node-major flatten + concat.
    onehot = jax.nn.one_hot(label, NUM_GRP, dtype=jnp.float32)        # (B, N, 4)
    xin = jnp.concatenate(
        [x.reshape(B, N * IN_DIM), onehot.reshape(B, N * NUM_GRP)], axis=1)

    def const_spec(arr):
        # Constant block index -> weight DMA'd once, resident across grid steps.
        return pl.BlockSpec(arr.shape, lambda b: (0, 0))

    grid_spec = pltpu.PrefetchScalarGridSpec(
        num_scalar_prefetch=0,
        grid=(B // BT,),
        in_specs=[
            pl.BlockSpec((BT, XIN), lambda b: (b, 0)),
            const_spec(packed["w1"]), const_spec(packed["b1"]),
            const_spec(packed["w2"]), const_spec(packed["b2"]),
            const_spec(packed["wh"]), const_spec(packed["bh"]),
            const_spec(packed["wv"]), const_spec(packed["bv"]),
        ],
        out_specs=(
            pl.BlockSpec((BT, HEAD_PV), lambda b: (b, 0)),
            pl.BlockSpec((BT, 1), lambda b: (b, 0)),
        ),
    )

    pv, v = pl.pallas_call(
        acnet_kernel,
        out_shape=(jax.ShapeDtypeStruct((B, HEAD_PV), jnp.float32),
                   jax.ShapeDtypeStruct((B, 1), jnp.float32)),
        grid_spec=grid_spec,
        compiler_params=pltpu.CompilerParams(
            dimension_semantics=("parallel",)),
    )(xin,
      packed["w1"], packed["b1"], packed["w2"], packed["b2"],
      packed["wh"], packed["bh"], packed["wv"], packed["bv"])

    pi = pv[:, :N * N]
    vm = pv[:, N * N:]
    return pi, v, vm


def _reference_single(x, label, params):
    """Pure-JAX per-state reference matching the PyTorch forward exactly."""
    we, be = params["emb"]
    wa1, ba1 = params["agg1"]
    wa2, ba2 = params["agg2"]
    wp, bp = params["policy"]
    wv, bv = params["value"]
    wvm, bvm = params["valueM"]
    onehot = jax.nn.one_hot(label, NUM_GRP, dtype=jnp.float32)
    emb = x @ we.T + be
    x1 = jax.nn.relu(jnp.concatenate([emb, onehot], axis=1) @ wa1.T + ba1)
    x2 = jax.nn.relu(x1 @ wa2.T + ba2)
    h = x2.reshape(-1)
    return h @ wp.T + bp, h @ wv.T + bv, h @ wvm.T + bvm


_reference = jax.vmap(_reference_single, in_axes=(0, 0, None))


if __name__ == "__main__":
    key = jax.random.PRNGKey(0)
    kx, kl, kp = jax.random.split(key, 3)

    B = 16   # batch of states (amortizes launch overhead + weight DMA)
    x = jax.random.normal(kx, (B, N, IN_DIM), dtype=jnp.float32)
    label = jax.random.randint(kl, (B, N), 0, NUM_GRP, dtype=jnp.int32)

    params = make_params(kp)
    packed = pack_params(params)   # one-time packing, outside the jitted forward

    pi, v, vm = acnet_forward(x, label, packed)
    jax.block_until_ready((pi, v, vm))

    pi_r, v_r, vm_r = _reference(x, label, params)
    np.testing.assert_allclose(np.asarray(pi), np.asarray(pi_r), rtol=1e-5, atol=2e-5)
    np.testing.assert_allclose(np.asarray(v), np.asarray(v_r), rtol=1e-5, atol=2e-5)
    np.testing.assert_allclose(np.asarray(vm), np.asarray(vm_r), rtol=1e-5, atol=2e-5)

    print("KERNEL_OK")
</pallas_src>

<mosaic_0001>
module attributes {stable_mosaic.version = 11 : i64} {
  func.func @acnet_kernel(%arg0: i32, %arg1: memref<16x64xf32, #tpu.memory_space<vmem>>, %arg2: memref<64x256xf32, #tpu.memory_space<vmem>>, %arg3: memref<1x256xf32, #tpu.memory_space<vmem>>, %arg4: memref<256x256xf32, #tpu.memory_space<vmem>>, %arg5: memref<1x256xf32, #tpu.memory_space<vmem>>, %arg6: memref<256x128xf32, #tpu.memory_space<vmem>>, %arg7: memref<1x128xf32, #tpu.memory_space<vmem>>, %arg8: memref<1x256xf32, #tpu.memory_space<vmem>>, %arg9: memref<1x1xf32, #tpu.memory_space<vmem>>, %arg10: memref<16x128xf32, #tpu.memory_space<vmem>>, %arg11: memref<16x1xf32, #tpu.memory_space<vmem>>) attributes {dimension_semantics = [#tpu.dimension_semantics<parallel>], iteration_bounds = array<i64: 1>, scalar_prefetch = 0 : i64, scratch_operands = 0 : i64, tpu.core_type = #tpu.core_type<tc>, window_params = [{transform_indices = @transform_0, window_bounds = array<i64: 16, 64>}, {pipeline_mode = #tpu.pipeline_mode<synchronous>, transform_indices = @transform_1, window_bounds = array<i64: 64, 256>}, {pipeline_mode = #tpu.pipeline_mode<synchronous>, transform_indices = @transform_2, window_bounds = array<i64: 1, 256>}, {pipeline_mode = #tpu.pipeline_mode<synchronous>, transform_indices = @transform_3, window_bounds = array<i64: 256, 256>}, {pipeline_mode = #tpu.pipeline_mode<synchronous>, transform_indices = @transform_4, window_bounds = array<i64: 1, 256>}, {pipeline_mode = #tpu.pipeline_mode<synchronous>, transform_indices = @transform_5, window_bounds = array<i64: 256, 128>}, {pipeline_mode = #tpu.pipeline_mode<synchronous>, transform_indices = @transform_6, window_bounds = array<i64: 1, 128>}, {pipeline_mode = #tpu.pipeline_mode<synchronous>, transform_indices = @transform_7, window_bounds = array<i64: 1, 256>}, {pipeline_mode = #tpu.pipeline_mode<synchronous>, transform_indices = @transform_8, window_bounds = array<i64: 1, 1>}, {transform_indices = @transform_9, window_bounds = array<i64: 16, 128>}, {transform_indices = @transform_10, window_bounds = array<i64: 16, 1>}]} {
    %c0 = arith.constant 0 : index
    %c0_0 = arith.constant 0 : index
    %0 = vector.load %arg1[%c0, %c0_0] : memref<16x64xf32, #tpu.memory_space<vmem>>, vector<16x64xf32>
    %c0_1 = arith.constant 0 : index
    %c0_2 = arith.constant 0 : index
    %1 = vector.load %arg2[%c0_1, %c0_2] : memref<64x256xf32, #tpu.memory_space<vmem>>, vector<64x256xf32>
    %cst = arith.constant dense<0.000000e+00> : vector<16x256xf32>
    %2 = tpu.matmul %0, %1, %cst {dimension_numbers = #tpu.dot_dimension_numbers<[1], [0], [0], [1], [0, 0, 1, 1], [], []>} : vector<16x64xf32>, vector<64x256xf32>, vector<16x256xf32> -> vector<16x256xf32>
    %c0_3 = arith.constant 0 : index
    %c0_4 = arith.constant 0 : index
    %3 = vector.load %arg3[%c0_3, %c0_4] : memref<1x256xf32, #tpu.memory_space<vmem>>, vector<1x256xf32>
    %4 = vector.broadcast %3 : vector<1x256xf32> to vector<16x256xf32>
    %5 = arith.addf %2, %4 : vector<16x256xf32>
    %cst_5 = arith.constant 0.000000e+00 : f32
    %6 = vector.broadcast %cst_5 : f32 to vector<16x256xf32>
    %7 = arith.maximumf %5, %6 : vector<16x256xf32>
    %c0_6 = arith.constant 0 : index
    %c0_7 = arith.constant 0 : index
    %8 = vector.load %arg4[%c0_6, %c0_7] : memref<256x256xf32, #tpu.memory_space<vmem>>, vector<256x256xf32>
    %cst_8 = arith.constant dense<0.000000e+00> : vector<16x256xf32>
    %9 = tpu.matmul %7, %8, %cst_8 {dimension_numbers = #tpu.dot_dimension_numbers<[1], [0], [0], [1], [0, 0, 1, 1], [], []>} : vector<16x256xf32>, vector<256x256xf32>, vector<16x256xf32> -> vector<16x256xf32>
    %c0_9 = arith.constant 0 : index
    %c0_10 = arith.constant 0 : index
    %10 = vector.load %arg5[%c0_9, %c0_10] : memref<1x256xf32, #tpu.memory_space<vmem>>, vector<1x256xf32>
    %11 = vector.broadcast %10 : vector<1x256xf32> to vector<16x256xf32>
    %12 = arith.addf %9, %11 : vector<16x256xf32>
    %cst_11 = arith.constant 0.000000e+00 : f32
    %13 = vector.broadcast %cst_11 : f32 to vector<16x256xf32>
    %14 = arith.maximumf %12, %13 : vector<16x256xf32>
    %c0_12 = arith.constant 0 : index
    %c0_13 = arith.constant 0 : index
    %15 = vector.load %arg6[%c0_12, %c0_13] : memref<256x128xf32, #tpu.memory_space<vmem>>, vector<256x128xf32>
    %cst_14 = arith.constant dense<0.000000e+00> : vector<16x128xf32>
    %16 = tpu.matmul %14, %15, %cst_14 {dimension_numbers = #tpu.dot_dimension_numbers<[1], [0], [0], [1], [0, 0, 1, 1], [], []>} : vector<16x256xf32>, vector<256x128xf32>, vector<16x128xf32> -> vector<16x128xf32>
    %c0_15 = arith.constant 0 : index
    %c0_16 = arith.constant 0 : index
    %17 = vector.load %arg7[%c0_15, %c0_16] : memref<1x128xf32, #tpu.memory_space<vmem>>, vector<1x128xf32>
    %18 = vector.broadcast %17 : vector<1x128xf32> to vector<16x128xf32>
    %19 = arith.addf %16, %18 : vector<16x128xf32>
    %c0_17 = arith.constant 0 : index
    %c0_18 = arith.constant 0 : index
    %20 = vector.load %arg10[%c0_17, %c0_18] : memref<16x128xf32, #tpu.memory_space<vmem>>, vector<16x128xf32>
    tpu.vector_store %arg10[%c0_17, %c0_18], %19 {strides = array<i32>} : memref<16x128xf32, #tpu.memory_space<vmem>>, vector<16x128xf32>,
    %c0_19 = arith.constant 0 : index
    %c0_20 = arith.constant 0 : index
    %21 = vector.load %arg8[%c0_19, %c0_20] : memref<1x256xf32, #tpu.memory_space<vmem>>, vector<1x256xf32>
    %22 = vector.broadcast %21 : vector<1x256xf32> to vector<16x256xf32>
    %23 = arith.mulf %14, %22 : vector<16x256xf32>
    %cst_21 = arith.constant dense<0.000000e+00> : vector<16xf32>
    %24 = vector.multi_reduction <add>, %23, %cst_21 [1] : vector<16x256xf32> to vector<16xf32>
    %25 = vector.shape_cast %24 : vector<16xf32> to vector<16x1xf32>
    %c0_22 = arith.constant 0 : index
    %c0_23 = arith.constant 0 : index
    %26 = vector.load %arg9[%c0_22, %c0_23] : memref<1x1xf32, #tpu.memory_space<vmem>>, vector<1x1xf32>
    %27 = vector.broadcast %26 : vector<1x1xf32> to vector<16x1xf32>
    %28 = arith.addf %25, %27 : vector<16x1xf32>
    %c0_24 = arith.constant 0 : index
    %c0_25 = arith.constant 0 : index
    %29 = vector.load %arg11[%c0_24, %c0_25] : memref<16x1xf32, #tpu.memory_space<vmem>>, vector<16x1xf32>
    tpu.vector_store %arg11[%c0_24, %c0_25], %28 {strides = array<i32>} : memref<16x1xf32, #tpu.memory_space<vmem>>, vector<16x1xf32>,
    return
  }
  func.func @transform_0(%arg0: i32) -> (i32, i32) {
    %c0_i32 = arith.constant 0 : i32
    %c0_i32_0 = arith.constant 0 : i32
    return %arg0, %c0_i32 : i32, i32
  }
  func.func @transform_1(%arg0: i32) -> (i32, i32) {
    %c0_i32 = arith.constant 0 : i32
    %c0_i32_0 = arith.constant 0 : i32
    %c0_i32_1 = arith.constant 0 : i32
    return %c0_i32, %c0_i32_0 : i32, i32
  }
  func.func @transform_2(%arg0: i32) -> (i32, i32) {
    %c0_i32 = arith.constant 0 : i32
    %c0_i32_0 = arith.constant 0 : i32
    %c0_i32_1 = arith.constant 0 : i32
    return %c0_i32, %c0_i32_0 : i32, i32
  }
  func.func @transform_3(%arg0: i32) -> (i32, i32) {
    %c0_i32 = arith.constant 0 : i32
    %c0_i32_0 = arith.constant 0 : i32
    %c0_i32_1 = arith.constant 0 : i32
    return %c0_i32, %c0_i32_0 : i32, i32
  }
  func.func @transform_4(%arg0: i32) -> (i32, i32) {
    %c0_i32 = arith.constant 0 : i32
    %c0_i32_0 = arith.constant 0 : i32
    %c0_i32_1 = arith.constant 0 : i32
    return %c0_i32, %c0_i32_0 : i32, i32
  }
  func.func @transform_5(%arg0: i32) -> (i32, i32) {
    %c0_i32 = arith.constant 0 : i32
    %c0_i32_0 = arith.constant 0 : i32
    %c0_i32_1 = arith.constant 0 : i32
    return %c0_i32, %c0_i32_0 : i32, i32
  }
  func.func @transform_6(%arg0: i32) -> (i32, i32) {
    %c0_i32 = arith.constant 0 : i32
    %c0_i32_0 = arith.constant 0 : i32
    %c0_i32_1 = arith.constant 0 : i32
    return %c0_i32, %c0_i32_0 : i32, i32
  }
  func.func @transform_7(%arg0: i32) -> (i32, i32) {
    %c0_i32 = arith.constant 0 : i32
    %c0_i32_0 = arith.constant 0 : i32
    %c0_i32_1 = arith.constant 0 : i32
    return %c0_i32, %c0_i32_0 : i32, i32
  }
  func.func @transform_8(%arg0: i32) -> (i32, i32) {
    %c0_i32 = arith.constant 0 : i32
    %c0_i32_0 = arith.constant 0 : i32
    %c0_i32_1 = arith.constant 0 : i32
    return %c0_i32, %c0_i32_0 : i32, i32
  }
  func.func @transform_9(%arg0: i32) -> (i32, i32) {
    %c0_i32 = arith.constant 0 : i32
    %c0_i32_0 = arith.constant 0 : i32
    return %arg0, %c0_i32 : i32, i32
  }
  func.func @transform_10(%arg0: i32) -> (i32, i32) {
    %c0_i32 = arith.constant 0 : i32
    %c0_i32_0 = arith.constant 0 : i32
    return %arg0, %c0_i32 : i32, i32
  }
}

</mosaic_0001>

<llo_original>
// kernel: acnet_forward.1
$region0: #{acnet_forward.1}
  #allocation0 [shape = 'u32[]', space=smem, size = 0x4, offset = 0x4, fixed_abs, tag = 'smem constant byte address 0x4 - core index']
  #allocation1 [shape = 'u32[144,128]{1,0:T(1,128)}', space=vmem, size = 0x12000, scoped, tag = 'internal scratch']
  #allocation2 [shape = 'f32[1,1]{1,0:T(1,128)S(1)}', space=vmem, size = 0x200, scoped, tag = 'scoped memory for acnet_forward.1']
  %s0 = inlined_call_operand.vmem [shape: f32[16,64], index: 0, kind: input, shape index: {}]
  %s1 = inlined_call_operand.vmem [shape: f32[64,256], index: 1, kind: input, shape index: {}]
  %s2 = inlined_call_operand.vmem [shape: f32[1,256], index: 2, kind: input, shape index: {}]
  %s3 = inlined_call_operand.hbm [shape: f32[256,256], index: 3, kind: input, shape index: {}]
  %s4 = inlined_call_operand.vmem [shape: f32[1,256], index: 4, kind: input, shape index: {}]
  %s5 = inlined_call_operand.hbm [shape: f32[256,128], index: 5, kind: input, shape index: {}]
  %s6 = inlined_call_operand.vmem [shape: f32[1,128], index: 6, kind: input, shape index: {}]
  %s7 = inlined_call_operand.vmem [shape: f32[1,256], index: 7, kind: input, shape index: {}]
  %s8 = inlined_call_operand.<no memory space> [shape: f32[1,1], index: 8, kind: input, shape index: {}]
  %s9 = inlined_call_operand.vmem [shape: f32[16,128], index: 9, kind: output, shape index: {0}]
  %s10 = inlined_call_operand.vmem [shape: f32[16,1], index: 10, kind: output, shape index: {1}]
  %11 = xla_tuple %s9, %s10
  %s12 = sld [smem:[#allocation0]]
  $region62: #{acnet_forward.1} parent=0
    _
  %s14 = ssub.s32 1, %s12
  %s15 = scalar_select 0, %s14, %s12
  %v16 = vstv %s8
  %17 = vst [vmem:[#allocation2] sm:$0x1] %v16
  $region1: #{acnet_forward.1} parent=0
    #allocation3 [shape = 'u8[262144]{0}', space=vmem, size = 0x40000, scoped, tag = 'input window, operand 3, single buffered']
    #allocation4 [shape = 's32[1]{0}', space=sflag, size = 0x4, scoped, tag = 'scoped memory for acnet_forward.1']
    #allocation5 [shape = 'u8[131072]{0}', space=vmem, size = 0x20000, scoped, tag = 'input window, operand 5, single buffered']
    #allocation6 [shape = 's32[1]{0}', space=sflag, size = 0x4, scoped, tag = 'scoped memory for acnet_forward.1']
    %18 = vsyncpa [#allocation4], 0
    %19 = vsyncpa [#allocation6], 0
    // Predicated region
    $region2: #{acnet_forward.1} parent=1 // pred_check
      _
    $region3: #{acnet_forward.1} parent=1 // pred_check_branch
      %21 = sbr.rel (0) target = $region5
    $region4: #{acnet_forward.1} parent=1 // pred_region
      _
    $region5: #{acnet_forward.1} parent=1 // pred_fallthru
      _
    // Predicated region
    $region6: #{acnet_forward.1} parent=1 // pred_check
      _
    $region7: #{acnet_forward.1} parent=1 // pred_check_branch
      %23 = sbr.rel (0) target = $region9
    $region8: #{acnet_forward.1} parent=1 // pred_region
      _
    $region9: #{acnet_forward.1} parent=1 // pred_fallthru
      _
    // Predicated region
    $region10: #{acnet_forward.1} parent=1 // pred_check
      _
    $region11: #{acnet_forward.1} parent=1 // pred_check_branch
      %25 = sbr.rel (0) target = $region13
    $region12: #{acnet_forward.1} parent=1 // pred_region
      _
    $region13: #{acnet_forward.1} parent=1 // pred_fallthru
      _
    // Predicated region
    $region14: #{acnet_forward.1} parent=1 // pred_check
      _
    $region15: #{acnet_forward.1} parent=1 // pred_check_branch
      %27 = sbr.rel (0) target = $region17
    $region16: #{acnet_forward.1} parent=1 // pred_region
      %s29 = ssub.s32 8192, 8192
      %30 = vsyncadd [#allocation4], %s29
      %s31 = sshll.u32 [#allocation3], 4
      %s32 = int_to_ptr.vmem [resolvable:$true] %s31
      %37 = dma.hbm_to_vmem [thread:$0]  %s3, 8192, %s32, [#allocation4], 256, 256, 16
    $region17: #{acnet_forward.1} parent=1 // pred_fallthru
      _
    // Predicated region
    $region18: #{acnet_forward.1} parent=1 // pred_check
      _
    $region19: #{acnet_forward.1} parent=1 // pred_check_branch
      %39 = sbr.rel (0) target = $region21
    $region20: #{acnet_forward.1} parent=1 // pred_region
      _
    $region21: #{acnet_forward.1} parent=1 // pred_fallthru
      _
    // Predicated region
    $region22: #{acnet_forward.1} parent=1 // pred_check
      _
    $region23: #{acnet_forward.1} parent=1 // pred_check_branch
      %41 = sbr.rel (0) target = $region25
    $region24: #{acnet_forward.1} parent=1 // pred_region
      %s43 = ssub.s32 4096, 4096
      %44 = vsyncadd [#allocation6], %s43
      %s45 = sshll.u32 [#allocation5], 4
      %s46 = int_to_ptr.vmem [resolvable:$true] %s45
      %51 = dma.hbm_to_vmem [thread:$0]  %s5, 4096, %s46, [#allocation6], 128, 128, 8
    $region25: #{acnet_forward.1} parent=1 // pred_fallthru
      _
    // Predicated region
    $region26: #{acnet_forward.1} parent=1 // pred_check
      _
    $region27: #{acnet_forward.1} parent=1 // pred_check_branch
      %53 = sbr.rel (0) target = $region29
    $region28: #{acnet_forward.1} parent=1 // pred_region
      _
    $region29: #{acnet_forward.1} parent=1 // pred_fallthru
      _
    // Predicated region
    $region30: #{acnet_forward.1} parent=1 // pred_check
      _
    $region31: #{acnet_forward.1} parent=1 // pred_check_branch
      %55 = sbr.rel (0) target = $region33
    $region32: #{acnet_forward.1} parent=1 // pred_region
      _
    $region33: #{acnet_forward.1} parent=1 // pred_fallthru
      _
    // Predicated region
    $region34: #{acnet_forward.1} parent=1 // pred_check
      _
    $region35: #{acnet_forward.1} parent=1 // pred_check_branch
      %57 = sbr.rel (0) target = $region37
    $region36: #{acnet_forward.1} parent=1 // pred_region
      _
    $region37: #{acnet_forward.1} parent=1 // pred_fallthru
      _
    // Predicated region
    $region38: #{acnet_forward.1} parent=1 // pred_check
      _
    $region39: #{acnet_forward.1} parent=1 // pred_check_branch
      %59 = sbr.rel (0) target = $region41
    $region40: #{acnet_forward.1} parent=1 // pred_region
      %60 = dma.done [#allocation4], 8192
    $region41: #{acnet_forward.1} parent=1 // pred_fallthru
      _
    // Predicated region
    $region42: #{acnet_forward.1} parent=1 // pred_check
      _
    $region43: #{acnet_forward.1} parent=1 // pred_check_branch
      %62 = sbr.rel (0) target = $region45
    $region44: #{acnet_forward.1} parent=1 // pred_region
      %63 = dma.done [#allocation6], 4096
    $region45: #{acnet_forward.1} parent=1 // pred_fallthru
      _
    %v64 = vld [vmem:[%s0] sm:$0xff]
    %v65 = vld [vmem:[%s0 + $0x8] sm:$0xff]
    %v66 = vld [vmem:[%s1] sm:$0xff]
    %v67 = vld [vmem:[%s1 + $0x8] sm:$0xff]
    %v68 = vld [vmem:[%s1 + $0x10] sm:$0xff]
    %v69 = vld [vmem:[%s1 + $0x18] sm:$0xff]
    %v70 = vld [vmem:[%s1 + $0x20] sm:$0xff]
    %v71 = vld [vmem:[%s1 + $0x28] sm:$0xff]
    %v72 = vld [vmem:[%s1 + $0x30] sm:$0xff]
    %v73 = vld [vmem:[%s1 + $0x38] sm:$0xff]
    %v74 = vld [vmem:[%s1 + $0x40] sm:$0xff]
    %v75 = vld [vmem:[%s1 + $0x48] sm:$0xff]
    %v76 = vld [vmem:[%s1 + $0x50] sm:$0xff]
    %v77 = vld [vmem:[%s1 + $0x58] sm:$0xff]
    %v78 = vld [vmem:[%s1 + $0x60] sm:$0xff]
    %v79 = vld [vmem:[%s1 + $0x68] sm:$0xff]
    %v80 = vld [vmem:[%s1 + $0x70] sm:$0xff]
    %v81 = vld [vmem:[%s1 + $0x78] sm:$0xff]
    %v82 = vld [vmem:[%s2] sm:$0x3]
    %v84 = vlaneseq
    %v85 = vshrl.u32 %v84, 7
    %v86 = vsub.s32 0, %v85
    %v87 = vrot.slane %v82, %v86
    %v88 = vlaneseq
    %v89 = vshrl.u32 %v88, 7
    %v90 = vsub.s32 1, %v89
    %v91 = vrot.slane %v82, %v90
    %vm94 = vcmask 523264
    %v96 = vsel %vm94, %v64, 0
    %v99 = vsel %vm94, %v65, 0
    %101 = vmatprep.subr.mxu0 %v67
    %102 = vmatpush1.msra.mxu0 %v66
    %103 = vmatprep.subr.mxu0 %v69
    %104 = vmatpush1.msra.mxu0 %v68
    %105 = vmatprep.subr.mxu0 %v71
    %106 = vmatpush1.msra.mxu0 %v70
    %107 = vmatprep.subr.mxu0 %v73
    %108 = vmatpush1.msra.mxu0 %v72
    %109 = vmatprep.subr.mxu0 %v75
    %110 = vmatpush1.msra.mxu0 %v74
    %111 = vmatprep.subr.mxu0 %v77
    %112 = vmatpush1.msra.mxu0 %v76
    %113 = vmatprep.subr.mxu0 %v79
    %114 = vmatpush1.msra.mxu0 %v78
    %115 = vmatprep.subr.mxu0 %v81
    %116 = vmatpush1.msra.mxu0 %v80
    %117 = vmatprep.subr.mxu0 0.0
    %118 = vmatpush1.msra.mxu0 0.0
    %119 = vmatprep.subr.mxu0 0.0
    %120 = vmatpush1.msra.mxu0 0.0
    %121 = vmatprep.subr.mxu0 0.0
    %122 = vmatpush1.msra.mxu0 0.0
    %123 = vmatprep.subr.mxu0 0.0
    %124 = vmatpush1.msra.mxu0 0.0
    %125 = vmatprep.subr.mxu0 0.0
    %126 = vmatpush1.msra.mxu0 0.0
    %127 = vmatprep.subr.mxu0 0.0
    %128 = vmatpush1.msra.mxu0 0.0
    %129 = vmatprep.subr.mxu0 0.0
    %130 = vmatpush1.msra.mxu0 0.0
    %131 = vmatprep.subr.mxu0 0.0
    %132 = vmatpush1.msra.mxu0 0.0
    %133 = vmatprep.subr.mxu0 0.0
    %134 = vmatpush1.msra.mxu0 0.0
    %135 = vmatprep.subr.mxu0 0.0
    %136 = vmatpush1.msra.mxu0 0.0
    %137 = vmatprep.subr.mxu0 0.0
    %138 = vmatpush1.msra.mxu0 0.0
    %139 = vmatprep.subr.mxu0 0.0
    %140 = vmatpush1.msra.mxu0 0.0
    %141 = vmatprep.subr.mxu0 0.0
    %142 = vmatpush1.msra.mxu0 0.0
    %143 = vmatprep.subr.mxu0 0.0
    %144 = vmatpush1.msra.mxu0 0.0
    %145 = vmatprep.subr.mxu0 0.0
    %146 = vmatpush1.msra.mxu0 0.0
    %147 = vmatprep.subr.mxu0 0.0
    %148 = vmatpush1.msra.mxu0 0.0
    %149 = vmatprep.subr.mxu0 0.0
    %150 = vmatpush1.msra.mxu0 0.0
    %151 = vmatprep.subr.mxu0 0.0
    %152 = vmatpush1.msra.mxu0 0.0
    %153 = vmatprep.subr.mxu0 0.0
    %154 = vmatpush1.msra.mxu0 0.0
    %155 = vmatprep.subr.mxu0 0.0
    %156 = vmatpush1.msra.mxu0 0.0
    %157 = vmatprep.subr.mxu0 0.0
    %158 = vmatpush1.msra.mxu0 0.0
    %159 = vmatprep.subr.mxu0 0.0
    %160 = vmatpush1.msra.mxu0 0.0
    %161 = vmatprep.subr.mxu0 0.0
    %162 = vmatpush1.msra.mxu0 0.0
    %163 = vmatprep.subr.mxu0 0.0
    %164 = vmatpush1.msra.mxu0 0.0
    %165 = vmatprep.mubr.f32.mxu0 0.0
    %166 = vmatmul.mubr.f32.gmra.mrb[0].mxu0 %v96
    %v167 = vpop.f32.mrb[0].mxu0
    %v168 = vadd.f32 %v87, %v167
    %v169 = vpop.f32.mrb[0].mxu0
    %v170 = vadd.f32 %v91, %v169
    %171 = vmatprep.mubr.f32.mxu0 0.0
    %172 = vmatmul.mubr.f32.gmra.mrb[0].mxu0 %v99
    %v173 = vpop.f32.mrb[0].mxu0
    %v174 = vadd.f32 %v87, %v173
    %v175 = vpop.f32.mrb[0].mxu0
    %v176 = vadd.f32 %v91, %v175
    %177 = vdwg.mxu0
    %v178 = vmax.f32 %v168, 0.0
    %v179 = vmax.f32 %v170, 0.0
    %v180 = vmax.f32 %v174, 0.0
    %v181 = vmax.f32 %v176, 0.0
    %v182 = vld [vmem:[#allocation3] sm:$0xff]
    %v183 = vld [vmem:[#allocation3 + $0x8] sm:$0xff]
    %v184 = vld [vmem:[#allocation3 + $0x10] sm:$0xff]
    %v185 = vld [vmem:[#allocation3 + $0x18] sm:$0xff]
    %v186 = vld [vmem:[#allocation3 + $0x20] sm:$0xff]
    %v187 = vld [vmem:[#allocation3 + $0x28] sm:$0xff]
    %v188 = vld [vmem:[#allocation3 + $0x30] sm:$0xff]
    %v189 = vld [vmem:[#allocation3 + $0x38] sm:$0xff]
    %v190 = vld [vmem:[#allocation3 + $0x40] sm:$0xff]
    %v191 = vld [vmem:[#allocation3 + $0x48] sm:$0xff]
    %v192 = vld [vmem:[#allocation3 + $0x50] sm:$0xff]
    %v193 = vld [vmem:[#allocation3 + $0x58] sm:$0xff]
    %v194 = vld [vmem:[#allocation3 + $0x60] sm:$0xff]
    %v195 = vld [vmem:[#allocation3 + $0x68] sm:$0xff]
    %v196 = vld [vmem:[#allocation3 + $0x70] sm:$0xff]
    %v197 = vld [vmem:[#allocation3 + $0x78] sm:$0xff]
    %v198 = vld [vmem:[#allocation3 + $0x80] sm:$0xff]
    %v199 = vld [vmem:[#allocation3 + $0x88] sm:$0xff]
    %v200 = vld [vmem:[#allocation3 + $0x90] sm:$0xff]
    %v201 = vld [vmem:[#allocation3 + $0x98] sm:$0xff]
    %v202 = vld [vmem:[#allocation3 + $0xa0] sm:$0xff]
    %v203 = vld [vmem:[#allocation3 + $0xa8] sm:$0xff]
    %v204 = vld [vmem:[#allocation3 + $0xb0] sm:$0xff]
    %v205 = vld [vmem:[#allocation3 + $0xb8] sm:$0xff]
    %v206 = vld [vmem:[#allocation3 + $0xc0] sm:$0xff]
    %v207 = vld [vmem:[#allocation3 + $0xc8] sm:$0xff]
    %v208 = vld [vmem:[#allocation3 + $0xd0] sm:$0xff]
    %v209 = vld [vmem:[#allocation3 + $0xd8] sm:$0xff]
    %v210 = vld [vmem:[#allocation3 + $0xe0] sm:$0xff]
    %v211 = vld [vmem:[#allocation3 + $0xe8] sm:$0xff]
    %v212 = vld [vmem:[#allocation3 + $0xf0] sm:$0xff]
    %v213 = vld [vmem:[#allocation3 + $0xf8] sm:$0xff]
    %v214 = vld [vmem:[#allocation3 + $0x100] sm:$0xff]
    %v215 = vld [vmem:[#allocation3 + $0x108] sm:$0xff]
    %v216 = vld [vmem:[#allocation3 + $0x110] sm:$0xff]
    %v217 = vld [vmem:[#allocation3 + $0x118] sm:$0xff]
    %v218 = vld [vmem:[#allocation3 + $0x120] sm:$0xff]
    %v219 = vld [vmem:[#allocation3 + $0x128] sm:$0xff]
    %v220 = vld [vmem:[#allocation3 + $0x130] sm:$0xff]
    %v221 = vld [vmem:[#allocation3 + $0x138] sm:$0xff]
    %v222 = vld [vmem:[#allocation3 + $0x140] sm:$0xff]
    %v223 = vld [vmem:[#allocation3 + $0x148] sm:$0xff]
    %v224 = vld [vmem:[#allocation3 + $0x150] sm:$0xff]
    %v225 = vld [vmem:[#allocation3 + $0x158] sm:$0xff]
    %v226 = vld [vmem:[#allocation3 + $0x160] sm:$0xff]
    %v227 = vld [vmem:[#allocation3 + $0x168] sm:$0xff]
    %v228 = vld [vmem:[#allocation3 + $0x170] sm:$0xff]
    %v229 = vld [vmem:[#allocation3 + $0x178] sm:$0xff]
    %v230 = vld [vmem:[#allocation3 + $0x180] sm:$0xff]
    %v231 = vld [vmem:[#allocation3 + $0x188] sm:$0xff]
    %v232 = vld [vmem:[#allocation3 + $0x190] sm:$0xff]
    %v233 = vld [vmem:[#allocation3 + $0x198] sm:$0xff]
    %v234 = vld [vmem:[#allocation3 + $0x1a0] sm:$0xff]
    %v235 = vld [vmem:[#allocation3 + $0x1a8] sm:$0xff]
    %v236 = vld [vmem:[#allocation3 + $0x1b0] sm:$0xff]
    %v237 = vld [vmem:[#allocation3 + $0x1b8] sm:$0xff]
    %v238 = vld [vmem:[#allocation3 + $0x1c0] sm:$0xff]
    %v239 = vld [vmem:[#allocation3 + $0x1c8] sm:$0xff]
    %v240 = vld [vmem:[#allocation3 + $0x1d0] sm:$0xff]
    %v241 = vld [vmem:[#allocation3 + $0x1d8] sm:$0xff]
    %v242 = vld [vmem:[#allocation3 + $0x1e0] sm:$0xff]
    %v243 = vld [vmem:[#allocation3 + $0x1e8] sm:$0xff]
    %v244 = vld [vmem:[#allocation3 + $0x1f0] sm:$0xff]
    %v245 = vld [vmem:[#allocation3 + $0x1f8] sm:$0xff]
    %v246 = vld [vmem:[%s4] sm:$0x3]
    %v248 = vlaneseq
    %v249 = vshrl.u32 %v248, 7
    %v250 = vsub.s32 0, %v249
    %v251 = vrot.slane %v246, %v250
    %v252 = vlaneseq
    %v253 = vshrl.u32 %v252, 7
    %v254 = vsub.s32 1, %v253
    %v255 = vrot.slane %v246, %v254
    %258 = vmatprep.subr.mxu0 %v183
    %259 = vmatpush1.msra.mxu0 %v182
    %260 = vmatprep.subr.mxu0 %v185
    %261 = vmatpush1.msra.mxu0 %v184
    %262 = vmatprep.subr.mxu0 %v187
    %263 = vmatpush1.msra.mxu0 %v186
    %264 = vmatprep.subr.mxu0 %v189
    %265 = vmatpush1.msra.mxu0 %v188
    %266 = vmatprep.subr.mxu0 %v191
    %267 = vmatpush1.msra.mxu0 %v190
    %268 = vmatprep.subr.mxu0 %v193
    %269 = vmatpush1.msra.mxu0 %v192
    %270 = vmatprep.subr.mxu0 %v195
    %271 = vmatpush1.msra.mxu0 %v194
    %272 = vmatprep.subr.mxu0 %v197
    %273 = vmatpush1.msra.mxu0 %v196
    %274 = vmatprep.subr.mxu0 %v199
    %275 = vmatpush1.msra.mxu0 %v198
    %276 = vmatprep.subr.mxu0 %v201
    %277 = vmatpush1.msra.mxu0 %v200
    %278 = vmatprep.subr.mxu0 %v203
    %279 = vmatpush1.msra.mxu0 %v202
    %280 = vmatprep.subr.mxu0 %v205
    %281 = vmatpush1.msra.mxu0 %v204
    %282 = vmatprep.subr.mxu0 %v207
    %283 = vmatpush1.msra.mxu0 %v206
    %284 = vmatprep.subr.mxu0 %v209
    %285 = vmatpush1.msra.mxu0 %v208
    %286 = vmatprep.subr.mxu0 %v211
    %287 = vmatpush1.msra.mxu0 %v210
    %288 = vmatprep.subr.mxu0 %v213
    %289 = vmatpush1.msra.mxu0 %v212
    %290 = vmatprep.subr.mxu0 %v215
    %291 = vmatpush1.msra.mxu0 %v214
    %292 = vmatprep.subr.mxu0 %v217
    %293 = vmatpush1.msra.mxu0 %v216
    %294 = vmatprep.subr.mxu0 %v219
    %295 = vmatpush1.msra.mxu0 %v218
    %296 = vmatprep.subr.mxu0 %v221
    %297 = vmatpush1.msra.mxu0 %v220
    %298 = vmatprep.subr.mxu0 %v223
    %299 = vmatpush1.msra.mxu0 %v222
    %300 = vmatprep.subr.mxu0 %v225
    %301 = vmatpush1.msra.mxu0 %v224
    %302 = vmatprep.subr.mxu0 %v227
    %303 = vmatpush1.msra.mxu0 %v226
    %304 = vmatprep.subr.mxu0 %v229
    %305 = vmatpush1.msra.mxu0 %v228
    %306 = vmatprep.subr.mxu0 %v231
    %307 = vmatpush1.msra.mxu0 %v230
    %308 = vmatprep.subr.mxu0 %v233
    %309 = vmatpush1.msra.mxu0 %v232
    %310 = vmatprep.subr.mxu0 %v235
    %311 = vmatpush1.msra.mxu0 %v234
    %312 = vmatprep.subr.mxu0 %v237
    %313 = vmatpush1.msra.mxu0 %v236
    %314 = vmatprep.subr.mxu0 %v239
    %315 = vmatpush1.msra.mxu0 %v238
    %316 = vmatprep.subr.mxu0 %v241
    %317 = vmatpush1.msra.mxu0 %v240
    %318 = vmatprep.subr.mxu0 %v243
    %319 = vmatpush1.msra.mxu0 %v242
    %320 = vmatprep.subr.mxu0 %v245
    %321 = vmatpush1.msra.mxu0 %v244
    %322 = vmatprep.mubr.f32.mxu0 %v179
    %323 = vmatmul.mubr.f32.gmra.mrb[0].mxu0 %v178
    %v324 = vpop.f32.mrb[0].mxu0
    %v325 = vadd.f32 %v251, %v324
    %v326 = vpop.f32.mrb[0].mxu0
    %v327 = vadd.f32 %v255, %v326
    %328 = vmatprep.mubr.f32.mxu0 %v181
    %329 = vmatmul.mubr.f32.gmra.mrb[0].mxu0 %v180
    %v330 = vpop.f32.mrb[0].mxu0
    %v331 = vadd.f32 %v251, %v330
    %v332 = vpop.f32.mrb[0].mxu0
    %v333 = vadd.f32 %v255, %v332
    %334 = vdwg.mxu0
    %v335 = vmax.f32 %v325, 0.0
    %v336 = vmax.f32 %v327, 0.0
    %v337 = vmax.f32 %v331, 0.0
    %v338 = vmax.f32 %v333, 0.0
    %v339 = vld [vmem:[#allocation5] sm:$0xff]
    %v340 = vld [vmem:[#allocation5 + $0x8] sm:$0xff]
    %v341 = vld [vmem:[#allocation5 + $0x10] sm:$0xff]
    %v342 = vld [vmem:[#allocation5 + $0x18] sm:$0xff]
    %v343 = vld [vmem:[#allocation5 + $0x20] sm:$0xff]
    %v344 = vld [vmem:[#allocation5 + $0x28] sm:$0xff]
    %v345 = vld [vmem:[#allocation5 + $0x30] sm:$0xff]
    %v346 = vld [vmem:[#allocation5 + $0x38] sm:$0xff]
    %v347 = vld [vmem:[#allocation5 + $0x40] sm:$0xff]
    %v348 = vld [vmem:[#allocation5 + $0x48] sm:$0xff]
    %v349 = vld [vmem:[#allocation5 + $0x50] sm:$0xff]
    %v350 = vld [vmem:[#allocation5 + $0x58] sm:$0xff]
    %v351 = vld [vmem:[#allocation5 + $0x60] sm:$0xff]
    %v352 = vld [vmem:[#allocation5 + $0x68] sm:$0xff]
    %v353 = vld [vmem:[#allocation5 + $0x70] sm:$0xff]
    %v354 = vld [vmem:[#allocation5 + $0x78] sm:$0xff]
    %v355 = vld [vmem:[#allocation5 + $0x80] sm:$0xff]
    %v356 = vld [vmem:[#allocation5 + $0x88] sm:$0xff]
    %v357 = vld [vmem:[#allocation5 + $0x90] sm:$0xff]
    %v358 = vld [vmem:[#allocation5 + $0x98] sm:$0xff]
    %v359 = vld [vmem:[#allocation5 + $0xa0] sm:$0xff]
    %v360 = vld [vmem:[#allocation5 + $0xa8] sm:$0xff]
    %v361 = vld [vmem:[#allocation5 + $0xb0] sm:$0xff]
    %v362 = vld [vmem:[#allocation5 + $0xb8] sm:$0xff]
    %v363 = vld [vmem:[#allocation5 + $0xc0] sm:$0xff]
    %v364 = vld [vmem:[#allocation5 + $0xc8] sm:$0xff]
    %v365 = vld [vmem:[#allocation5 + $0xd0] sm:$0xff]
    %v366 = vld [vmem:[#allocation5 + $0xd8] sm:$0xff]
    %v367 = vld [vmem:[#allocation5 + $0xe0] sm:$0xff]
    %v368 = vld [vmem:[#allocation5 + $0xe8] sm:$0xff]
    %v369 = vld [vmem:[#allocation5 + $0xf0] sm:$0xff]
    %v370 = vld [vmem:[#allocation5 + $0xf8] sm:$0xff]
    %v371 = vld [vmem:[%s6] sm:$0x1]
    %v373 = vlaneseq
    %v374 = vshrl.u32 %v373, 7
    %v375 = vsub.s32 0, %v374
    %v376 = vrot.slane %v371, %v375
    %378 = vmatprep.subr.mxu0 0.0
    %379 = vmatpush1.msra.mxu0 %v339
    %380 = vmatprep.subr.mxu0 0.0
    %381 = vmatpush1.msra.mxu0 %v340
    %382 = vmatprep.subr.mxu0 0.0
    %383 = vmatpush1.msra.mxu0 %v341
    %384 = vmatprep.subr.mxu0 0.0
    %385 = vmatpush1.msra.mxu0 %v342
    %386 = vmatprep.subr.mxu0 0.0
    %387 = vmatpush1.msra.mxu0 %v343
    %388 = vmatprep.subr.mxu0 0.0
    %389 = vmatpush1.msra.mxu0 %v344
    %390 = vmatprep.subr.mxu0 0.0
    %391 = vmatpush1.msra.mxu0 %v345
    %392 = vmatprep.subr.mxu0 0.0
    %393 = vmatpush1.msra.mxu0 %v346
    %394 = vmatprep.subr.mxu0 0.0
    %395 = vmatpush1.msra.mxu0 %v347
    %396 = vmatprep.subr.mxu0 0.0
    %397 = vmatpush1.msra.mxu0 %v348
    %398 = vmatprep.subr.mxu0 0.0
    %399 = vmatpush1.msra.mxu0 %v349
    %400 = vmatprep.subr.mxu0 0.0
    %401 = vmatpush1.msra.mxu0 %v350
    %402 = vmatprep.subr.mxu0 0.0
    %403 = vmatpush1.msra.mxu0 %v351
    %404 = vmatprep.subr.mxu0 0.0
    %405 = vmatpush1.msra.mxu0 %v352
    %406 = vmatprep.subr.mxu0 0.0
    %407 = vmatpush1.msra.mxu0 %v353
    %408 = vmatprep.subr.mxu0 0.0
    %409 = vmatpush1.msra.mxu0 %v354
    %410 = vmatprep.subr.mxu0 0.0
    %411 = vmatpush1.msra.mxu0 %v355
    %412 = vmatprep.subr.mxu0 0.0
    %413 = vmatpush1.msra.mxu0 %v356
    %414 = vmatprep.subr.mxu0 0.0
    %415 = vmatpush1.msra.mxu0 %v357
    %416 = vmatprep.subr.mxu0 0.0
    %417 = vmatpush1.msra.mxu0 %v358
    %418 = vmatprep.subr.mxu0 0.0
    %419 = vmatpush1.msra.mxu0 %v359
    %420 = vmatprep.subr.mxu0 0.0
    %421 = vmatpush1.msra.mxu0 %v360
    %422 = vmatprep.subr.mxu0 0.0
    %423 = vmatpush1.msra.mxu0 %v361
    %424 = vmatprep.subr.mxu0 0.0
    %425 = vmatpush1.msra.mxu0 %v362
    %426 = vmatprep.subr.mxu0 0.0
    %427 = vmatpush1.msra.mxu0 %v363
    %428 = vmatprep.subr.mxu0 0.0
    %429 = vmatpush1.msra.mxu0 %v364
    %430 = vmatprep.subr.mxu0 0.0
    %431 = vmatpush1.msra.mxu0 %v365
    %432 = vmatprep.subr.mxu0 0.0
    %433 = vmatpush1.msra.mxu0 %v366
    %434 = vmatprep.subr.mxu0 0.0
    %435 = vmatpush1.msra.mxu0 %v367
    %436 = vmatprep.subr.mxu0 0.0
    %437 = vmatpush1.msra.mxu0 %v368
    %438 = vmatprep.subr.mxu0 0.0
    %439 = vmatpush1.msra.mxu0 %v369
    %440 = vmatprep.subr.mxu0 0.0
    %441 = vmatpush1.msra.mxu0 %v370
    %442 = vmatprep.mubr.f32.mxu0 %v336
    %443 = vmatmul.mubr.f32.gmra.mrb[0].mxu0 %v335
    %v444 = vpop.f32.mrb[0].mxu0
    %v445 = vadd.f32 %v376, %v444
    %v446 = vpop.f32.mrb[0].mxu0
    %447 = vmatprep.mubr.f32.mxu0 %v338
    %448 = vmatmul.mubr.f32.gmra.mrb[0].mxu0 %v337
    %v449 = vpop.f32.mrb[0].mxu0
    %v450 = vadd.f32 %v376, %v449
    %v451 = vpop.f32.mrb[0].mxu0
    %452 = vdwg.mxu0
    %453 = vst [vmem:[%s9] sm:$0xff] %v445
    %454 = vst [vmem:[%s9 + $0x8] sm:$0xff] %v450
    %v455 = vld [vmem:[%s7] sm:$0x3]
    %v457 = vlaneseq
    %v458 = vshrl.u32 %v457, 7
    %v459 = vsub.s32 0, %v458
    %v460 = vrot.slane %v455, %v459
    %v461 = vlaneseq
    %v462 = vshrl.u32 %v461, 7
    %v463 = vsub.s32 1, %v462
    %v464 = vrot.slane %v455, %v463
    %v467 = vmul.f32 %v335, %v460
    %v468 = vmul.f32 %v336, %v464
    %v469 = vmul.f32 %v337, %v460
    %v470 = vmul.f32 %v338, %v464
    %v471 = vadd.f32 %v467, %v468
    %472 = vadd.xlane.f32.xlu0 %v471
    %v473 = vpop.xlane.xlu0 %472
    %v474 = vadd.f32 %v469, %v470
    %475 = vadd.xlane.f32.xlu0 %v474
    %v476 = vpop.xlane.xlu0 %475
    %v477 = vld [vmem:[#allocation2] sm:$0x1]
    %v479 = vlaneseq
    %v480 = vshrl.u32 %v479, 7
    %v481 = vsub.s32 0, %v480
    %v482 = vrot.slane %v477, %v481
    %v484 = vadd.f32 %v473, %v482
    %v485 = vadd.f32 %v476, %v482
    %vm486 = vcmask 7168
    %487 = vst.msk [vmem:[%s10] sm:$0xff] %vm486, %v484
    %488 = vst.msk [vmem:[%s10 + $0x8] sm:$0xff] %vm486, %v485
    // Predicated region
    $region46: #{acnet_forward.1} parent=1 // pred_check
      _
    $region47: #{acnet_forward.1} parent=1 // pred_check_branch
      %490 = sbr.rel (0) target = $region49
    $region48: #{acnet_forward.1} parent=1 // pred_region
      _
    $region49: #{acnet_forward.1} parent=1 // pred_fallthru
      _
    // Predicated region
    $region50: #{acnet_forward.1} parent=1 // pred_check
      _
    $region51: #{acnet_forward.1} parent=1 // pred_check_branch
      %492 = sbr.rel (0) target = $region53
    $region52: #{acnet_forward.1} parent=1 // pred_region
      _
    $region53: #{acnet_forward.1} parent=1 // pred_fallthru
      _
    // Predicated region
    $region54: #{acnet_forward.1} parent=1 // pred_check
      _
    $region55: #{acnet_forward.1} parent=1 // pred_check_branch
      %494 = sbr.rel (0) target = $region57
    $region56: #{acnet_forward.1} parent=1 // pred_region
      _
    $region57: #{acnet_forward.1} parent=1 // pred_fallthru
      _
    // Predicated region
    $region58: #{acnet_forward.1} parent=1 // pred_check
      _
    $region59: #{acnet_forward.1} parent=1 // pred_check_branch
      %496 = sbr.rel (0) target = $region61
    $region60: #{acnet_forward.1} parent=1 // pred_region
      _
    $region61: #{acnet_forward.1} parent=1 // pred_fallthru
      _
    %497 = vsyncpa [#allocation4], 1
    %498 = vsyncpa [#allocation6], 1

</llo_original>
